<compile_context>
chip_gen: v7x
topology: tpu7x:2x2x1
jax: 0.10.0
libtpu: 0.0.40
codegen_flags: <defaults>
</compile_context>

<pallas_src>
import functools

import jax
import jax.numpy as jnp
from jax.experimental import pallas as pl
from jax.experimental.pallas import tpu as pltpu

_VMEM = pltpu.MemorySpace.VMEM
_SMEM = pltpu.MemorySpace.SMEM


# ---------------------------------------------------------------------------
# Shared in-kernel math
# ---------------------------------------------------------------------------
def _logits(x_ref, w_ref, b_ref):
    """logits = x @ W^T + b, with W (out, in) consumed untransposed."""
    return jax.lax.dot_general(
        x_ref[...], w_ref[...],
        dimension_numbers=(((1,), (1,)), ((), ())),  # contract x dim1 with W dim1
        preferred_element_type=jnp.float32,
    ) + b_ref[...]


def _softmax_stats(logits):
    """Row max / shifted exp / denominator — computed once, shared by both paths."""
    m = jnp.max(logits, axis=1, keepdims=True)
    e = jnp.exp(logits - m)
    denom = jnp.sum(e, axis=1, keepdims=True)
    return m, e, denom


def _ce_from_stats(logits, m, denom, y, inv_b):
    """mean( logsumexp(logits) - logits[argmax(y)] ), reusing softmax stats."""
    b, d = logits.shape
    lse = m + jnp.log(denom)                                         # (B, 1)

    # targets = argmax(y, axis=1), first-occurrence tie-break
    col = jax.lax.broadcasted_iota(jnp.int32, (b, d), 1)
    y_max = jnp.max(y, axis=1, keepdims=True)
    idx = jnp.min(jnp.where(y == y_max, col, d), axis=1, keepdims=True)

    # logit at the target index (no one-hot matmul, no full log_probs tile)
    tgt_logit = jnp.sum(jnp.where(col == idx, logits, 0.0),
                        axis=1, keepdims=True)                       # (B, 1)

    return jnp.sum(lse - tgt_logit) * inv_b


# ---------------------------------------------------------------------------
# Kernels
# ---------------------------------------------------------------------------
def _linear_softmax_kernel(x_ref, w_ref, b_ref, o_ref):
    logits = _logits(x_ref, w_ref, b_ref)
    _, e, denom = _softmax_stats(logits)
    o_ref[...] = (e * pl.reciprocal(denom, approx=True)).astype(o_ref.dtype)


def _linear_ce_kernel(x_ref, w_ref, b_ref, y_ref, loss_ref, *, inv_b):
    logits = _logits(x_ref, w_ref, b_ref)
    m, _, denom = _softmax_stats(logits)
    loss_ref[0, 0] = _ce_from_stats(logits, m, denom, y_ref[...], inv_b)


def _linear_fused_kernel(x_ref, w_ref, b_ref, y_ref, probs_ref, loss_ref, *, inv_b):
    logits = _logits(x_ref, w_ref, b_ref)
    m, e, denom = _softmax_stats(logits)
    probs_ref[...] = (e * pl.reciprocal(denom, approx=True)).astype(probs_ref.dtype)
    loss_ref[0, 0] = _ce_from_stats(logits, m, denom, y_ref[...], inv_b)


# ---------------------------------------------------------------------------
# Wrappers (jit'ed so plumbing + pallas_call compile into one executable)
# ---------------------------------------------------------------------------
@jax.jit
def torch_model_infer(x, W, b):
    B, D = x.shape
    return pl.pallas_call(
        _linear_softmax_kernel,
        out_shape=jax.ShapeDtypeStruct((B, D), jnp.float32),
        in_specs=[pl.BlockSpec(memory_space=_VMEM)] * 3,
        out_specs=pl.BlockSpec(memory_space=_VMEM),
    )(x, W, b.reshape(1, D))


@jax.jit
def torch_model_loss(x, W, b, y):
    B, D = x.shape
    loss = pl.pallas_call(
        functools.partial(_linear_ce_kernel, inv_b=1.0 / B),
        out_shape=jax.ShapeDtypeStruct((1, 1), jnp.float32),
        in_specs=[pl.BlockSpec(memory_space=_VMEM)] * 4,
        out_specs=pl.BlockSpec(memory_space=_SMEM),
    )(x, W, b.reshape(1, D), y)
    return loss[0, 0]


@jax.jit
def torch_model_forward_fused(x, W, b, y):
    """When both probs and loss are wanted: one matmul, shared softmax stats."""
    B, D = x.shape
    probs, loss = pl.pallas_call(
        functools.partial(_linear_fused_kernel, inv_b=1.0 / B),
        out_shape=(jax.ShapeDtypeStruct((B, D), jnp.float32),
                   jax.ShapeDtypeStruct((1, 1), jnp.float32)),
        in_specs=[pl.BlockSpec(memory_space=_VMEM)] * 4,
        out_specs=(pl.BlockSpec(memory_space=_VMEM),
                   pl.BlockSpec(memory_space=_SMEM)),
    )(x, W, b.reshape(1, D), y)
    return probs, loss[0, 0]


def torch_model_forward(x, W, b, y=None):
    """Replicates TorchModel.forward. W is (out, in) as in nn.Linear."""
    if y is None:
        return torch_model_infer(x, W, b)
    return torch_model_loss(x, W, b, y)


# ---------------------------------------------------------------------------
# Pure-JAX reference (sanity check)
# ---------------------------------------------------------------------------
def _ref_forward(x, W, b, y=None):
    logits = x @ W.T + b
    if y is None:
        return jax.nn.softmax(logits, axis=1)
    targets = jnp.argmax(y, axis=1)
    logp = jax.nn.log_softmax(logits, axis=1)
    return -jnp.mean(jnp.take_along_axis(logp, targets[:, None], axis=1))


if __name__ == "__main__":
    B, D = 8, 32                          # batch, input_size (== num classes)

    key = jax.random.PRNGKey(0)
    kx, kw, kb, ky = jax.random.split(key, 4)

    x = jax.random.normal(kx, (B, D), dtype=jnp.float32)
    W = jax.random.normal(kw, (D, D), dtype=jnp.float32) * 0.1   # Linear weight (out, in)
    b = jax.random.normal(kb, (D,), dtype=jnp.float32) * 0.1     # Linear bias
    y = jax.random.normal(ky, (B, D), dtype=jnp.float32)         # soft labels -> argmax

    # Inference path
    probs = jax.block_until_ready(torch_model_forward(x, W, b))
    # Training path
    loss = jax.block_until_ready(torch_model_forward(x, W, b, y))
    # Fused path (shared matmul + shared softmax stats)
    probs_f, loss_f = torch_model_forward_fused(x, W, b, y)
    probs_f = jax.block_until_ready(probs_f)
    loss_f = jax.block_until_ready(loss_f)

    ref_p = _ref_forward(x, W, b)
    ref_l = _ref_forward(x, W, b, y)

    # approx=True reciprocal on the EUP -> slightly loosened probs tolerance
    assert jnp.allclose(probs, ref_p, atol=2e-3, rtol=2e-3)
    assert jnp.allclose(probs_f, ref_p, atol=2e-3, rtol=2e-3)
    assert jnp.allclose(loss, ref_l, atol=1e-4, rtol=1e-4)
    assert jnp.allclose(loss_f, ref_l, atol=1e-4, rtol=1e-4)

    print("KERNEL_OK")
</pallas_src>

<mosaic_0001>
module attributes {stable_mosaic.version = 11 : i64} {
  func.func @_linear_softmax_kernel(%arg0: memref<8x32xf32, #tpu.memory_space<vmem>>, %arg1: memref<32x32xf32, #tpu.memory_space<vmem>>, %arg2: memref<1x32xf32, #tpu.memory_space<vmem>>, %arg3: memref<8x32xf32, #tpu.memory_space<vmem>>) attributes {dimension_semantics = [], scalar_prefetch = 0 : i64, scratch_operands = 0 : i64, tpu.core_type = #tpu.core_type<tc>} {
    %c0 = arith.constant 0 : index
    %c0_0 = arith.constant 0 : index
    %0 = vector.load %arg0[%c0, %c0_0] : memref<8x32xf32, #tpu.memory_space<vmem>>, vector<8x32xf32>
    %c0_1 = arith.constant 0 : index
    %c0_2 = arith.constant 0 : index
    %1 = vector.load %arg1[%c0_1, %c0_2] : memref<32x32xf32, #tpu.memory_space<vmem>>, vector<32x32xf32>
    %cst = arith.constant dense<0.000000e+00> : vector<8x32xf32>
    %2 = tpu.matmul %0, %1, %cst {dimension_numbers = #tpu.dot_dimension_numbers<[1], [1], [0], [0], [0, 0, 1, 0], [], []>} : vector<8x32xf32>, vector<32x32xf32>, vector<8x32xf32> -> vector<8x32xf32>
    %c0_3 = arith.constant 0 : index
    %c0_4 = arith.constant 0 : index
    %3 = vector.load %arg2[%c0_3, %c0_4] : memref<1x32xf32, #tpu.memory_space<vmem>>, vector<1x32xf32>
    %4 = vector.broadcast %3 : vector<1x32xf32> to vector<8x32xf32>
    %5 = arith.addf %2, %4 : vector<8x32xf32>
    %cst_5 = arith.constant dense<0xFF800000> : vector<8xf32>
    %6 = vector.multi_reduction <maximumf>, %5, %cst_5 [1] : vector<8x32xf32> to vector<8xf32>
    %7 = vector.shape_cast %6 : vector<8xf32> to vector<8x1xf32>
    %8 = vector.broadcast %7 : vector<8x1xf32> to vector<8x32xf32>
    %9 = arith.subf %5, %8 : vector<8x32xf32>
    %10 = math.exp %9 : vector<8x32xf32>
    %cst_6 = arith.constant dense<0.000000e+00> : vector<8xf32>
    %11 = vector.multi_reduction <add>, %10, %cst_6 [1] : vector<8x32xf32> to vector<8xf32>
    %12 = vector.shape_cast %11 : vector<8xf32> to vector<8x1xf32>
    %13 = tpu.reciprocal %12 {approx = true} : vector<8x1xf32> -> vector<8x1xf32>
    %14 = vector.broadcast %13 : vector<8x1xf32> to vector<8x32xf32>
    %15 = arith.mulf %10, %14 : vector<8x32xf32>
    %c0_7 = arith.constant 0 : index
    %c0_8 = arith.constant 0 : index
    %16 = vector.load %arg3[%c0_7, %c0_8] : memref<8x32xf32, #tpu.memory_space<vmem>>, vector<8x32xf32>
    tpu.vector_store %arg3[%c0_7, %c0_8], %15 {strides = array<i32>} : memref<8x32xf32, #tpu.memory_space<vmem>>, vector<8x32xf32>,
    return
  }
}

</mosaic_0001>

<llo_original>
// kernel: torch_model_infer.1
$region0: #{torch_model_infer.1}
  #allocation0 [shape = 'u32[]', space=smem, size = 0x4, offset = 0x4, fixed_abs, tag = 'smem constant byte address 0x4 - core index']
  #allocation1 [shape = 'u32[144,128]{1,0:T(1,128)}', space=vmem, size = 0x12000, scoped, tag = 'internal scratch']
  %s0 = inlined_call_operand.hbm [shape: f32[8,32], index: 0, kind: input, shape index: {}]
  %s1 = inlined_call_operand.hbm [shape: f32[32,32], index: 1, kind: input, shape index: {}]
  %s2 = inlined_call_operand.vmem [shape: f32[1,32], index: 2, kind: input, shape index: {}]
  %s3 = inlined_call_operand.hbm [shape: f32[8,32], index: 3, kind: output, shape index: {}]
  %s4 = sld [smem:[#allocation0]]
  $region30: #{torch_model_infer.1} parent=0
    _
  %s6 = ssub.s32 1, %s4
  %s7 = scalar_select 0, %s6, %s4
  $region1: #{torch_model_infer.1} parent=0
    #allocation2 [shape = 'u8[4096]{0}', space=vmem, size = 0x1000, scoped, tag = 'input window, operand 0, single buffered']
    #allocation3 [shape = 's32[1]{0}', space=sflag, size = 0x4, scoped, tag = 'scoped memory for torch_model_infer.1']
    #allocation4 [shape = 's32[1]{0}', space=sflag, size = 0x4, scoped, tag = 'scoped memory for torch_model_infer.1']
    #allocation5 [shape = 'u8[16384]{0}', space=vmem, size = 0x4000, scoped, tag = 'input window, operand 1, single buffered']
    #allocation6 [shape = 's32[1]{0}', space=sflag, size = 0x4, scoped, tag = 'scoped memory for torch_model_infer.1']
    #allocation7 [shape = 'u8[4096]{0}', space=vmem, size = 0x1000, scoped, tag = 'output window, operand 0, single buffered']
    %8 = vsyncpa [#allocation3], 0
    %9 = vsyncpa [#allocation6], 0
    %10 = vsyncpa [#allocation4], 0
    // Predicated region
    $region2: #{torch_model_infer.1} parent=1 // pred_check
      _
    $region3: #{torch_model_infer.1} parent=1 // pred_check_branch
      %12 = sbr.rel (0) target = $region5
    $region4: #{torch_model_infer.1} parent=1 // pred_region
      %s14 = ssub.s32 128, 128
      %15 = vsyncadd [#allocation3], %s14
      %s17 = sshll.u32 [#allocation2], 4
      %s18 = int_to_ptr.vmem [resolvable:$true] %s17
      %20 = dma.hbm_to_vmem [thread:$0]  %s0, 128, %s18, [#allocation3]
    $region5: #{torch_model_infer.1} parent=1 // pred_fallthru
      _
    // Predicated region
    $region6: #{torch_model_infer.1} parent=1 // pred_check
      _
    $region7: #{torch_model_infer.1} parent=1 // pred_check_branch
      %22 = sbr.rel (0) target = $region9
    $region8: #{torch_model_infer.1} parent=1 // pred_region
      %s24 = ssub.s32 512, 512
      %25 = vsyncadd [#allocation6], %s24
      %s26 = sshll.u32 [#allocation5], 4
      %s27 = int_to_ptr.vmem [resolvable:$true] %s26
      %32 = dma.hbm_to_vmem [thread:$0]  %s1, 512, %s27, [#allocation6], 128, 128, 8
    $region9: #{torch_model_infer.1} parent=1 // pred_fallthru
      _
    // Predicated region
    $region10: #{torch_model_infer.1} parent=1 // pred_check
      _
    $region11: #{torch_model_infer.1} parent=1 // pred_check_branch
      %34 = sbr.rel (0) target = $region13
    $region12: #{torch_model_infer.1} parent=1 // pred_region
      _
    $region13: #{torch_model_infer.1} parent=1 // pred_fallthru
      _
    // Predicated region
    $region14: #{torch_model_infer.1} parent=1 // pred_check
      _
    $region15: #{torch_model_infer.1} parent=1 // pred_check_branch
      %36 = sbr.rel (0) target = $region17
    $region16: #{torch_model_infer.1} parent=1 // pred_region
      %37 = dma.done [#allocation3], 128
    $region17: #{torch_model_infer.1} parent=1 // pred_fallthru
      _
    // Predicated region
    $region18: #{torch_model_infer.1} parent=1 // pred_check
      _
    $region19: #{torch_model_infer.1} parent=1 // pred_check_branch
      %39 = sbr.rel (0) target = $region21
    $region20: #{torch_model_infer.1} parent=1 // pred_region
      %40 = dma.done [#allocation6], 512
    $region21: #{torch_model_infer.1} parent=1 // pred_fallthru
      _
    %v41 = vld [vmem:[#allocation2] sm:$0xff]
    %v42 = vld [vmem:[#allocation5] sm:$0xff]
    %v43 = vld [vmem:[#allocation5 + $0x8] sm:$0xff]
    %v44 = vld [vmem:[#allocation5 + $0x10] sm:$0xff]
    %v45 = vld [vmem:[#allocation5 + $0x18] sm:$0xff]
    %v46 = vld [vmem:[%s2] sm:$0x1]
    %v48 = vlaneseq
    %v49 = vshrl.u32 %v48, 7
    %v50 = vsub.s32 0, %v49
    %v51 = vrot.slane %v46, %v50
    %vm53 = vcmask 261120
    %v55 = vsel %vm53, %v41, 0
    %v58 = vsel %vm53, %v42, 0
    %v61 = vsel %vm53, %v43, 0
    %v64 = vsel %vm53, %v44, 0
    %v67 = vsel %vm53, %v45, 0
    %69 = vmatprep.subr.mxu0 0.0
    %70 = vmatpush1.xpose.msra.mxu0 %v58
    %71 = vmatprep.subr.mxu0 0.0
    %72 = vmatpush1.xpose.msra.mxu0 %v61
    %73 = vmatprep.subr.mxu0 0.0
    %74 = vmatpush1.xpose.msra.mxu0 %v64
    %75 = vmatprep.subr.mxu0 0.0
    %76 = vmatpush1.xpose.msra.mxu0 %v67
    %77 = vmatprep.subr.mxu0 0.0
    %78 = vmatpush1.xpose.msra.mxu0 0.0
    %79 = vmatprep.subr.mxu0 0.0
    %80 = vmatpush1.xpose.msra.mxu0 0.0
    %81 = vmatprep.subr.mxu0 0.0
    %82 = vmatpush1.xpose.msra.mxu0 0.0
    %83 = vmatprep.subr.mxu0 0.0
    %84 = vmatpush1.xpose.msra.mxu0 0.0
    %85 = vmatprep.subr.mxu0 0.0
    %86 = vmatpush1.xpose.msra.mxu0 0.0
    %87 = vmatprep.subr.mxu0 0.0
    %88 = vmatpush1.xpose.msra.mxu0 0.0
    %89 = vmatprep.subr.mxu0 0.0
    %90 = vmatpush1.xpose.msra.mxu0 0.0
    %91 = vmatprep.subr.mxu0 0.0
    %92 = vmatpush1.xpose.msra.mxu0 0.0
    %93 = vmatprep.subr.mxu0 0.0
    %94 = vmatpush1.xpose.msra.mxu0 0.0
    %95 = vmatprep.subr.mxu0 0.0
    %96 = vmatpush1.xpose.msra.mxu0 0.0
    %97 = vmatprep.subr.mxu0 0.0
    %98 = vmatpush1.xpose.msra.mxu0 0.0
    %99 = vmatprep.subr.mxu0 0.0
    %100 = vmatpush1.xpose.msra.mxu0 0.0
    %101 = vmatprep.subr.mxu0 0.0
    %102 = vmatpush1.xpose.msra.mxu0 0.0
    %103 = vmatprep.subr.mxu0 0.0
    %104 = vmatpush1.xpose.msra.mxu0 0.0
    %105 = vmatprep.subr.mxu0 0.0
    %106 = vmatpush1.xpose.msra.mxu0 0.0
    %107 = vmatprep.subr.mxu0 0.0
    %108 = vmatpush1.xpose.msra.mxu0 0.0
    %109 = vmatprep.subr.mxu0 0.0
    %110 = vmatpush1.xpose.msra.mxu0 0.0
    %111 = vmatprep.subr.mxu0 0.0
    %112 = vmatpush1.xpose.msra.mxu0 0.0
    %113 = vmatprep.subr.mxu0 0.0
    %114 = vmatpush1.xpose.msra.mxu0 0.0
    %115 = vmatprep.subr.mxu0 0.0
    %116 = vmatpush1.xpose.msra.mxu0 0.0
    %117 = vmatprep.subr.mxu0 0.0
    %118 = vmatpush1.xpose.msra.mxu0 0.0
    %119 = vmatprep.subr.mxu0 0.0
    %120 = vmatpush1.xpose.msra.mxu0 0.0
    %121 = vmatprep.subr.mxu0 0.0
    %122 = vmatpush1.xpose.msra.mxu0 0.0
    %123 = vmatprep.subr.mxu0 0.0
    %124 = vmatpush1.xpose.msra.mxu0 0.0
    %125 = vmatprep.subr.mxu0 0.0
    %126 = vmatpush1.xpose.msra.mxu0 0.0
    %127 = vmatprep.subr.mxu0 0.0
    %128 = vmatpush1.xpose.msra.mxu0 0.0
    %129 = vmatprep.subr.mxu0 0.0
    %130 = vmatpush1.xpose.msra.mxu0 0.0
    %131 = vmatprep.subr.mxu0 0.0
    %132 = vmatpush1.xpose.msra.mxu0 0.0
    %133 = vmatprep.mubr.f32.mxu0 0.0
    %134 = vmatmul.mubr.f32.gmra.mrb[0].mxu0 %v55
    %v135 = vpop.f32.mrb[0].mxu0
    %v136 = vadd.f32 %v51, %v135
    %v137 = vpop.f32.mrb[0].mxu0
    %138 = vdwg.mxu0
    %v139 = vsel %vm53, %v136, -inf
    %140 = vmax.xlane.f32.xlu0 %v139
    %v141 = vpop.xlane.xlu0 %140
    %v142 = vsub.f32 %v136, %v141
    %v143 = vmul.f32 %v142, 1.442695
    %v144 = vpow.pop %v143
    %v145 = vsel %vm53, %v144, 0.0
    %146 = vadd.xlane.f32.xlu0 %v145
    %v147 = vpop.xlane.xlu0 %146
    %v148 = vrcp.pop %v147
    %v149 = vmul.f32 %v144, %v148
    %150 = vst.msk [vmem:[#allocation7] sm:$0xff] %vm53, %v149
    // Predicated region
    $region22: #{torch_model_infer.1} parent=1 // pred_check
      _
    $region23: #{torch_model_infer.1} parent=1 // pred_check_branch
      %152 = sbr.rel (0) target = $region25
    $region24: #{torch_model_infer.1} parent=1 // pred_region
      %s154 = ssub.s32 128, 128
      %155 = vsyncadd [#allocation4], %s154
      %s157 = sshll.u32 [#allocation7], 4
      %s158 = int_to_ptr.vmem [resolvable:$true] %s157
      %160 = dma.vmem_to_hbm [thread:$0]  %s158, 128, %s3, [#allocation4]
    $region25: #{torch_model_infer.1} parent=1 // pred_fallthru
      _
    // Predicated region
    $region26: #{torch_model_infer.1} parent=1 // pred_check
      _
    $region27: #{torch_model_infer.1} parent=1 // pred_check_branch
      %162 = sbr.rel (0) target = $region29
    $region28: #{torch_model_infer.1} parent=1 // pred_region
      %163 = dma.done [#allocation4], 128
    $region29: #{torch_model_infer.1} parent=1 // pred_fallthru
      _
    %164 = vsyncpa [#allocation3], 1
    %165 = vsyncpa [#allocation6], 1
    %166 = vsyncpa [#allocation4], 1

</llo_original>
